<compile_context>
chip_gen: v6e
topology: v6e:2x2x1
jax: 0.10.0
libtpu: 0.0.40
codegen_flags: <defaults>
</compile_context>

<pallas_src>
from functools import partial

import jax
import jax.numpy as jnp
from jax.experimental import pallas as pl
from jax.experimental.pallas import tpu as pltpu


def _elu_feature_map(x):
    # elu(x) + 1  ==  x + 1   (x > 0)
    #             ==  exp(x)  (x <= 0)
    return jnp.where(x > 0, x + 1.0, jnp.exp(x))


def _linear_attention_kernel(q_ref, k_ref, v_ref, o_ref, kv_ref, *,
                             num_heads, head_dim, v_dim, eps, mxu_dtype):
    """One grid step = (one batch element) x (one tile of L), all heads.

    q_ref : [block_l, H*D]   (lane-dense)
    k_ref : [S, H*D]         (block index constant over the L axis -> resident)
    v_ref : [S, H*Dv]
    o_ref : [block_l, H*Dv]
    kv_ref: [H, D, Dv+1] f32 scratch; kv_ref[h, :, :Dv] = K_h^T V_h and
            kv_ref[h, :, Dv]  = sum_s K_h[s, :]  (fused denominator column).
    """
    H, D, Dv = num_heads, head_dim, v_dim
    l_idx = pl.program_id(1)

    # KV (and the fused K-sum column) depend only on K/V: compute once per batch.
    @pl.when(l_idx == 0)
    def _compute_kv():
        K = _elu_feature_map(k_ref[...].astype(jnp.float32))       # [S, H*D]
        V = v_ref[...].astype(jnp.float32)                         # [S, H*Dv]
        ones = jnp.ones((K.shape[0], 1), jnp.float32)
        for h in range(H):
            k_h = K[:, h * D:(h + 1) * D].astype(mxu_dtype)        # [S, D]
            v_h = jnp.concatenate(
                [V[:, h * Dv:(h + 1) * Dv], ones], axis=1
            ).astype(mxu_dtype)                                    # [S, Dv+1]
            # K_h^T @ [V_h | 1]  ->  [D, Dv+1]
            kv_ref[h] = jax.lax.dot_general(
                k_h, v_h,
                dimension_numbers=(((0,), (0,)), ((), ())),
                preferred_element_type=jnp.float32)

    Q = _elu_feature_map(q_ref[...].astype(jnp.float32))           # [block_l, H*D]

    outs = []
    for h in range(H):
        q_h = Q[:, h * D:(h + 1) * D].astype(mxu_dtype)            # [block_l, D]
        kv_h = kv_ref[h].astype(mxu_dtype)                         # [D, Dv+1]
        o_aug = jnp.dot(q_h, kv_h, preferred_element_type=jnp.float32)
        denom = o_aug[:, Dv:Dv + 1] + eps                          # [block_l, 1]
        z = pl.reciprocal(denom, approx=True)
        outs.append(o_aug[:, :Dv] * z)                             # [block_l, Dv]

    out = jnp.concatenate(outs, axis=1)                            # [block_l, H*Dv]
    o_ref[...] = out.astype(o_ref.dtype)


def linear_attention(queries, keys, values, eps=1e-6, block_l=None):
    """queries: [N, L, H, D], keys: [N, S, H, D], values: [N, S, H, Dv].
    Returns [N, L, H, Dv] — matches PyTorch LinearAttention.forward."""
    N, L, H, D = queries.shape
    _, S, _, Dv = values.shape

    # Merge (H, D) into one lane-dense trailing axis. These reshapes are free
    # (contiguous, metadata only) — no HBM transpose passes.
    q3 = queries.reshape(N, L, H * D)
    k3 = keys.reshape(N, S, H * D)
    v3 = values.reshape(N, S, H * Dv)

    if block_l is None:
        block_l = L if L <= 1024 else 1024
    block_l = min(block_l, L)
    num_l = -(-L // block_l)
    L_pad = num_l * block_l
    if L_pad != L:
        q3 = jnp.pad(q3, ((0, 0), (0, L_pad - L), (0, 0)))

    mxu_dtype = jnp.bfloat16 if queries.dtype == jnp.bfloat16 else jnp.float32

    kernel = partial(_linear_attention_kernel, num_heads=H, head_dim=D,
                     v_dim=Dv, eps=float(eps), mxu_dtype=mxu_dtype)

    # Rough VMEM budget: double-buffered blocks + KV scratch, with headroom.
    isz = jnp.dtype(queries.dtype).itemsize
    est = 2 * isz * (block_l * H * D + S * H * D + S * H * Dv + block_l * H * Dv)
    est += 4 * H * max(D, 8) * 128
    vmem_limit = int(min(max(3 * est, 32 * 1024 * 1024), 48 * 1024 * 1024))

    out3 = pl.pallas_call(
        kernel,
        out_shape=jax.ShapeDtypeStruct((N, L_pad, H * Dv), queries.dtype),
        grid_spec=pltpu.PrefetchScalarGridSpec(
            num_scalar_prefetch=0,
            grid=(N, num_l),
            in_specs=[
                pl.BlockSpec((None, block_l, H * D), lambda n, l: (n, l, 0)),
                pl.BlockSpec((None, S, H * D), lambda n, l: (n, 0, 0)),
                pl.BlockSpec((None, S, H * Dv), lambda n, l: (n, 0, 0)),
            ],
            out_specs=pl.BlockSpec((None, block_l, H * Dv), lambda n, l: (n, l, 0)),
            scratch_shapes=[pltpu.VMEM((H, D, Dv + 1), jnp.float32)],
        ),
        compiler_params=pltpu.CompilerParams(
            # N is "parallel" (sharded across TensorCores on v7x); the L axis must
            # stay "arbitrary" because the cached KV scratch is reused across it.
            dimension_semantics=("parallel", "arbitrary"),
            vmem_limit_bytes=vmem_limit,
        ),
    )(q3, k3, v3)

    if L_pad != L:
        out3 = out3[:, :L, :]
    return out3.reshape(N, L, H, Dv)


def _reference_linear_attention(queries, keys, values, eps=1e-6):
    Q = _elu_feature_map(queries.astype(jnp.float32))
    K = _elu_feature_map(keys.astype(jnp.float32))
    S = values.shape[1]
    v = values.astype(jnp.float32) / S
    KV = jnp.einsum('nshd,nshv->nhdv', K, v)
    Z = 1.0 / (jnp.einsum('nlhd,nhd->nlh', Q, K.sum(axis=1)) + eps)
    return jnp.einsum('nlhd,nhdv,nlh->nlhv', Q, KV, Z) * S


if __name__ == "__main__":
    # Small shapes consistent with the module: N=2, L=16, S=8, H=2, D=32.
    key = jax.random.PRNGKey(0)
    kq, kk, kv = jax.random.split(key, 3)
    N, L, S, H, D = 2, 16, 8, 2, 32
    queries = jax.random.normal(kq, (N, L, H, D), dtype=jnp.float32)
    keys = jax.random.normal(kk, (N, S, H, D), dtype=jnp.float32)
    values = jax.random.normal(kv, (N, S, H, D), dtype=jnp.float32)

    ref = _reference_linear_attention(queries, keys, values)

    # Single L-tile path.
    out = jax.block_until_ready(linear_attention(queries, keys, values))
    assert out.shape == (N, L, H, D)
    # approx reciprocal -> slightly relaxed tolerance vs exact-divide reference.
    assert jnp.allclose(out, ref, atol=5e-3, rtol=5e-3)

    # Tiled-L path (exercises the cached-KV scratch across l iterations).
    out_tiled = jax.block_until_ready(
        linear_attention(queries, keys, values, block_l=8))
    assert jnp.allclose(out_tiled, ref, atol=5e-3, rtol=5e-3)

    print("KERNEL_OK")
</pallas_src>

<mosaic_0001>
module attributes {stable_mosaic.version = 11 : i64} {
  func.func @_linear_attention_kernel(%arg0: i32, %arg1: i32, %arg2: memref<1x16x64xf32, #tpu.memory_space<vmem>>, %arg3: memref<1x8x64xf32, #tpu.memory_space<vmem>>, %arg4: memref<1x8x64xf32, #tpu.memory_space<vmem>>, %arg5: memref<1x16x64xf32, #tpu.memory_space<vmem>>, %arg6: memref<2x32x33xf32, #tpu.memory_space<vmem>>) attributes {dimension_semantics = [#tpu.dimension_semantics<parallel>, #tpu.dimension_semantics<arbitrary>], iteration_bounds = array<i64: 2, 1>, scalar_prefetch = 0 : i64, scratch_operands = 1 : i64, tpu.core_type = #tpu.core_type<tc>, window_params = [{transform_indices = @transform_0, window_bounds = array<i64: 1, 16, 64>}, {transform_indices = @transform_1, window_bounds = array<i64: 1, 8, 64>}, {transform_indices = @transform_2, window_bounds = array<i64: 1, 8, 64>}, {transform_indices = @transform_3, window_bounds = array<i64: 1, 16, 64>}]} {
    %c0_i32 = arith.constant 0 : i32
    %0 = arith.cmpi eq, %arg1, %c0_i32 : i32
    %1 = arith.extui %0 : i1 to i32
    %c0_i32_0 = arith.constant 0 : i32
    %2 = arith.cmpi ne, %1, %c0_i32_0 : i32
    scf.if %2 {
      %c0_16 = arith.constant 0 : index
      %c0_17 = arith.constant 0 : index
      %c0_18 = arith.constant 0 : index
      %37 = vector.load %arg3[%c0_16, %c0_17, %c0_18] : memref<1x8x64xf32, #tpu.memory_space<vmem>>, vector<1x8x64xf32>
      %38 = vector.shape_cast %37 : vector<1x8x64xf32> to vector<8x64xf32>
      %cst_19 = arith.constant 0.000000e+00 : f32
      %39 = vector.broadcast %cst_19 : f32 to vector<8x64xf32>
      %40 = arith.cmpf ogt, %38, %39 : vector<8x64xf32>
      %cst_20 = arith.constant 1.000000e+00 : f32
      %41 = vector.broadcast %cst_20 : f32 to vector<8x64xf32>
      %42 = arith.addf %38, %41 : vector<8x64xf32>
      %43 = math.exp %38 : vector<8x64xf32>
      %44 = arith.select %40, %42, %43 : vector<8x64xi1>, vector<8x64xf32>
      %c0_21 = arith.constant 0 : index
      %c0_22 = arith.constant 0 : index
      %c0_23 = arith.constant 0 : index
      %45 = vector.load %arg4[%c0_21, %c0_22, %c0_23] : memref<1x8x64xf32, #tpu.memory_space<vmem>>, vector<1x8x64xf32>
      %46 = vector.shape_cast %45 : vector<1x8x64xf32> to vector<8x64xf32>
      %cst_24 = arith.constant 1.000000e+00 : f32
      %47 = vector.broadcast %cst_24 : f32 to vector<8x1xf32>
      %48 = vector.extract_strided_slice %44 {offsets = [0, 0], sizes = [8, 32], strides = [1, 1]} : vector<8x64xf32> to vector<8x32xf32>
      %49 = vector.extract_strided_slice %46 {offsets = [0, 0], sizes = [8, 32], strides = [1, 1]} : vector<8x64xf32> to vector<8x32xf32>
      %50 = tpu.concatenate %49, %47 in 1 : vector<8x32xf32>, vector<8x1xf32> -> vector<8x33xf32>
      %cst_25 = arith.constant dense<0.000000e+00> : vector<32x33xf32>
      %51 = tpu.matmul %48, %50, %cst_25 {dimension_numbers = #tpu.dot_dimension_numbers<[0], [0], [1], [1], [0, 1, 1, 1], [], []>} : vector<8x32xf32>, vector<8x33xf32>, vector<32x33xf32> -> vector<32x33xf32>
      %c0_26 = arith.constant 0 : index
      %c0_27 = arith.constant 0 : index
      %c0_28 = arith.constant 0 : index
      %52 = vector.load %arg6[%c0_26, %c0_27, %c0_28] : memref<2x32x33xf32, #tpu.memory_space<vmem>>, vector<1x32x33xf32>
      %53 = vector.shape_cast %52 : vector<1x32x33xf32> to vector<32x33xf32>
      %54 = vector.shape_cast %51 : vector<32x33xf32> to vector<1x32x33xf32>
      tpu.vector_store %arg6[%c0_26, %c0_27, %c0_28], %54 {strides = array<i32>} : memref<2x32x33xf32, #tpu.memory_space<vmem>>, vector<1x32x33xf32>,
      %55 = vector.extract_strided_slice %44 {offsets = [0, 32], sizes = [8, 32], strides = [1, 1]} : vector<8x64xf32> to vector<8x32xf32>
      %56 = vector.extract_strided_slice %46 {offsets = [0, 32], sizes = [8, 32], strides = [1, 1]} : vector<8x64xf32> to vector<8x32xf32>
      %57 = tpu.concatenate %56, %47 in 1 : vector<8x32xf32>, vector<8x1xf32> -> vector<8x33xf32>
      %cst_29 = arith.constant dense<0.000000e+00> : vector<32x33xf32>
      %58 = tpu.matmul %55, %57, %cst_29 {dimension_numbers = #tpu.dot_dimension_numbers<[0], [0], [1], [1], [0, 1, 1, 1], [], []>} : vector<8x32xf32>, vector<8x33xf32>, vector<32x33xf32> -> vector<32x33xf32>
      %c1_30 = arith.constant 1 : index
      %c0_31 = arith.constant 0 : index
      %c0_32 = arith.constant 0 : index
      %59 = vector.load %arg6[%c1_30, %c0_31, %c0_32] : memref<2x32x33xf32, #tpu.memory_space<vmem>>, vector<1x32x33xf32>
      %60 = vector.shape_cast %59 : vector<1x32x33xf32> to vector<32x33xf32>
      %61 = vector.shape_cast %58 : vector<32x33xf32> to vector<1x32x33xf32>
      tpu.vector_store %arg6[%c1_30, %c0_31, %c0_32], %61 {strides = array<i32>} : memref<2x32x33xf32, #tpu.memory_space<vmem>>, vector<1x32x33xf32>,
    } else {
    }
    %c0 = arith.constant 0 : index
    %c0_1 = arith.constant 0 : index
    %c0_2 = arith.constant 0 : index
    %3 = vector.load %arg2[%c0, %c0_1, %c0_2] : memref<1x16x64xf32, #tpu.memory_space<vmem>>, vector<1x16x64xf32>
    %4 = vector.shape_cast %3 : vector<1x16x64xf32> to vector<16x64xf32>
    %cst = arith.constant 0.000000e+00 : f32
    %5 = vector.broadcast %cst : f32 to vector<16x64xf32>
    %6 = arith.cmpf ogt, %4, %5 : vector<16x64xf32>
    %cst_3 = arith.constant 1.000000e+00 : f32
    %7 = vector.broadcast %cst_3 : f32 to vector<16x64xf32>
    %8 = arith.addf %4, %7 : vector<16x64xf32>
    %9 = math.exp %4 : vector<16x64xf32>
    %10 = arith.select %6, %8, %9 : vector<16x64xi1>, vector<16x64xf32>
    %11 = vector.extract_strided_slice %10 {offsets = [0, 0], sizes = [16, 32], strides = [1, 1]} : vector<16x64xf32> to vector<16x32xf32>
    %c0_4 = arith.constant 0 : index
    %c0_5 = arith.constant 0 : index
    %c0_6 = arith.constant 0 : index
    %12 = vector.load %arg6[%c0_4, %c0_5, %c0_6] : memref<2x32x33xf32, #tpu.memory_space<vmem>>, vector<1x32x33xf32>
    %13 = vector.shape_cast %12 : vector<1x32x33xf32> to vector<32x33xf32>
    %cst_7 = arith.constant dense<0.000000e+00> : vector<16x33xf32>
    %14 = tpu.matmul %11, %13, %cst_7 {dimension_numbers = #tpu.dot_dimension_numbers<[1], [0], [0], [1], [0, 0, 1, 1], [], []>} : vector<16x32xf32>, vector<32x33xf32>, vector<16x33xf32> -> vector<16x33xf32>
    %15 = vector.extract_strided_slice %14 {offsets = [0, 32], sizes = [16, 1], strides = [1, 1]} : vector<16x33xf32> to vector<16x1xf32>
    %cst_8 = arith.constant 9.99999997E-7 : f32
    %16 = vector.broadcast %cst_8 : f32 to vector<16x1xf32>
    %17 = arith.addf %15, %16 : vector<16x1xf32>
    %18 = tpu.reciprocal %17 {approx = true} : vector<16x1xf32> -> vector<16x1xf32>
    %19 = vector.extract_strided_slice %14 {offsets = [0, 0], sizes = [16, 32], strides = [1, 1]} : vector<16x33xf32> to vector<16x32xf32>
    %20 = vector.broadcast %18 : vector<16x1xf32> to vector<16x32xf32>
    %21 = arith.mulf %19, %20 : vector<16x32xf32>
    %22 = vector.extract_strided_slice %10 {offsets = [0, 32], sizes = [16, 32], strides = [1, 1]} : vector<16x64xf32> to vector<16x32xf32>
    %c1 = arith.constant 1 : index
    %c0_9 = arith.constant 0 : index
    %c0_10 = arith.constant 0 : index
    %23 = vector.load %arg6[%c1, %c0_9, %c0_10] : memref<2x32x33xf32, #tpu.memory_space<vmem>>, vector<1x32x33xf32>
    %24 = vector.shape_cast %23 : vector<1x32x33xf32> to vector<32x33xf32>
    %cst_11 = arith.constant dense<0.000000e+00> : vector<16x33xf32>
    %25 = tpu.matmul %22, %24, %cst_11 {dimension_numbers = #tpu.dot_dimension_numbers<[1], [0], [0], [1], [0, 0, 1, 1], [], []>} : vector<16x32xf32>, vector<32x33xf32>, vector<16x33xf32> -> vector<16x33xf32>
    %26 = vector.extract_strided_slice %25 {offsets = [0, 32], sizes = [16, 1], strides = [1, 1]} : vector<16x33xf32> to vector<16x1xf32>
    %cst_12 = arith.constant 9.99999997E-7 : f32
    %27 = vector.broadcast %cst_12 : f32 to vector<16x1xf32>
    %28 = arith.addf %26, %27 : vector<16x1xf32>
    %29 = tpu.reciprocal %28 {approx = true} : vector<16x1xf32> -> vector<16x1xf32>
    %30 = vector.extract_strided_slice %25 {offsets = [0, 0], sizes = [16, 32], strides = [1, 1]} : vector<16x33xf32> to vector<16x32xf32>
    %31 = vector.broadcast %29 : vector<16x1xf32> to vector<16x32xf32>
    %32 = arith.mulf %30, %31 : vector<16x32xf32>
    %33 = tpu.concatenate %21, %32 in 1 : vector<16x32xf32>, vector<16x32xf32> -> vector<16x64xf32>
    %c0_13 = arith.constant 0 : index
    %c0_14 = arith.constant 0 : index
    %c0_15 = arith.constant 0 : index
    %34 = vector.load %arg5[%c0_13, %c0_14, %c0_15] : memref<1x16x64xf32, #tpu.memory_space<vmem>>, vector<1x16x64xf32>
    %35 = vector.shape_cast %34 : vector<1x16x64xf32> to vector<16x64xf32>
    %36 = vector.shape_cast %33 : vector<16x64xf32> to vector<1x16x64xf32>
    tpu.vector_store %arg5[%c0_13, %c0_14, %c0_15], %36 {strides = array<i32>} : memref<1x16x64xf32, #tpu.memory_space<vmem>>, vector<1x16x64xf32>,
    return
  }
  func.func @transform_0(%arg0: i32, %arg1: i32) -> (i32, i32, i32) {
    %c0_i32 = arith.constant 0 : i32
    %c0_i32_0 = arith.constant 0 : i32
    return %arg0, %arg1, %c0_i32 : i32, i32, i32
  }
  func.func @transform_1(%arg0: i32, %arg1: i32) -> (i32, i32, i32) {
    %c0_i32 = arith.constant 0 : i32
    %c0_i32_0 = arith.constant 0 : i32
    %c0_i32_1 = arith.constant 0 : i32
    return %arg0, %c0_i32, %c0_i32_0 : i32, i32, i32
  }
  func.func @transform_2(%arg0: i32, %arg1: i32) -> (i32, i32, i32) {
    %c0_i32 = arith.constant 0 : i32
    %c0_i32_0 = arith.constant 0 : i32
    %c0_i32_1 = arith.constant 0 : i32
    return %arg0, %c0_i32, %c0_i32_0 : i32, i32, i32
  }
  func.func @transform_3(%arg0: i32, %arg1: i32) -> (i32, i32, i32) {
    %c0_i32 = arith.constant 0 : i32
    %c0_i32_0 = arith.constant 0 : i32
    return %arg0, %arg1, %c0_i32 : i32, i32, i32
  }
}

</mosaic_0001>

<llo_original>
// kernel: tpu_custom_call.1
$region0: #{tpu_custom_call.1}
  #allocation0 [shape = 'u32[]', space=smem, size = 0x4, offset = 0x4, fixed_abs, tag = 'smem constant byte address 0x4 - core index']
  #allocation1 [shape = 'u32[144,128]{1,0:T(1,128)}', space=vmem, size = 0x12000, scoped, tag = 'internal scratch']
  #allocation2 [shape = 'f32[2,32,33]{2,1,0:T(8,128)}', space=vmem, size = 0x8000, scoped, tag = 'scratch operand']
  %s0 = inlined_call_operand.hbm [shape: f32[2,16,64], index: 0, kind: input, shape index: {}]
  %s1 = inlined_call_operand.hbm [shape: f32[2,8,64], index: 1, kind: input, shape index: {}]
  %s2 = inlined_call_operand.hbm [shape: f32[2,8,64], index: 2, kind: input, shape index: {}]
  %s3 = inlined_call_operand.hbm [shape: f32[2,16,64], index: 3, kind: output, shape index: {}]
  %s4 = sld [smem:[#allocation0]]
  $region61: #{tpu_custom_call.1} parent=0
    _
  %s6 = ssub.s32 1, %s4
  %s7 = scalar_select 0, %s6, %s4
  $region1: #{tpu_custom_call.1} parent=0
    #allocation3 [shape = 'u8[16384]{0}', space=vmem, size = 0x4000, scoped, tag = 'input window, operand 0']
    #allocation4 [shape = 's32[2]{0}', space=sflag, size = 0x8, scoped, tag = 'scoped memory for tpu_custom_call.1']
    #allocation5 [shape = 's32[2]{0}', space=sflag, size = 0x8, scoped, tag = 'scoped memory for tpu_custom_call.1']
    #allocation6 [shape = 'u8[8192]{0}', space=vmem, size = 0x2000, scoped, tag = 'input window, operand 1']
    #allocation7 [shape = 's32[2]{0}', space=sflag, size = 0x8, scoped, tag = 'scoped memory for tpu_custom_call.1']
    #allocation8 [shape = 'u8[8192]{0}', space=vmem, size = 0x2000, scoped, tag = 'input window, operand 2']
    #allocation9 [shape = 'u8[16384]{0}', space=vmem, size = 0x4000, scoped, tag = 'output window, operand 0']
    %8 = vsyncpa [#allocation4], 0
    %s9 = scalar_lea.sflag [#allocation4], 1
    %10 = vsyncpa %s9, 0
    %11 = vsyncpa [#allocation7], 0
    %s12 = scalar_lea.sflag [#allocation7], 1
    %13 = vsyncpa %s12, 0
    %14 = vsyncpa [#allocation5], 0
    %s15 = scalar_lea.sflag [#allocation5], 1
    %16 = vsyncpa %s15, 0
    loop: start=0, step=1, limit=4
    $region2: #{tpu_custom_call.1} parent=1 // loop_pre_header
      _
    $region3: #{tpu_custom_call.1} parent=1 // loop_header
      %s18 = sphi 0, %s22
      %p19 = scmp.ge.s32.totalorder %s18, 4
      %s25 = sphi 0, %s37
      %s26 = sphi 0, %s33
      %s27 = sphi 0, %s25
      %s28 = sphi 0, %s26
      %s29 = sphi 0, %s27
      %s30 = sphi 0, %s28
      %s42 = sphi 0, %s44
      %s45 = sphi 0, %s42
      %s46 = sphi 0, %s45
      %s62 = sphi 0, %s46
      %s68 = sphi 0, %s70
      %s71 = sphi 0, %s68
      %s72 = sphi 0, %s71
      %s88 = sphi 0, %s72
      %s94 = sphi 0, %s96
      %s97 = sphi 0, %s94
      %s98 = sphi 0, %s97
      %s114 = sphi 0, %s98
      %s122 = sphi 0, %s124
      %s125 = sphi 0, %s122
      %s126 = sphi 0, %s125
      %s142 = sphi 0, %s126
    $region4: #{tpu_custom_call.1} parent=1 // loop_header_branch
      %21 = sbr.rel (%p19) target = $region8
    $region5: #{tpu_custom_call.1} parent=1 // loop_body
      %s23 = ssub.s32 %s18, 1
      %s24 = ssub.s32 %s18, 2
      %s31 = sadd.s32 1, %s26
      %p32 = scmp.ge.s32.totalorder %s31, 1
      %s33 = scalar_select %p32, 0, %s31
      %s34 = sadd.s32 1, %s25
      %s35 = scalar_select %p32, %s34, %s25
      %p36 = scmp.ge.s32.totalorder %s35, 2
      %s37 = scalar_select %p36, 0, %s35
      %s38 = ssub.s32 %s25, %s37
      %s39 = ssub.s32 %s26, %s33
      %s40 = sor.u32 %s38, %s39
      %p41 = scmp.eq.s32.totalorder %s40, 0
      %s43 = sadd.s32 %s42, 1
      %s44 = scalar_select %p41, %s42, %s43
      %p47 = pneg %p41
      %p48 = scmp.eq.s32.totalorder %s18, 1
      %p49 = por %p47, %p48
      %p50 = scmp.ne.s32.totalorder %s42, %s45
      %p51 = scmp.eq.s32.totalorder %s18, 0
      %p52 = por %p50, %p51
      %p53 = scmp.ne.s32.totalorder %s42, %s45
      %p54 = scmp.eq.s32.totalorder %s23, 1
      %p55 = por %p53, %p54
      %p56 = scmp.ne.s32.totalorder %s45, %s46
      %p57 = scmp.eq.s32.totalorder %s23, 0
      %p58 = por %p56, %p57
      %p59 = scmp.ne.s32.totalorder %s45, %s46
      %p60 = scmp.eq.s32.totalorder %s24, 1
      %p61 = por %p59, %p60
      %p63 = scmp.ne.s32.totalorder %s46, %s62
      %p64 = scmp.eq.s32.totalorder %s24, 0
      %p65 = por %p63, %p64
      %s66 = ssub.s32 %s25, %s37
      %p67 = scmp.eq.s32.totalorder %s66, 0
      %s69 = sadd.s32 %s68, 1
      %s70 = scalar_select %p67, %s68, %s69
      %p73 = pneg %p67
      %p74 = scmp.eq.s32.totalorder %s18, 1
      %p75 = por %p73, %p74
      %p76 = scmp.ne.s32.totalorder %s68, %s71
      %p77 = scmp.eq.s32.totalorder %s18, 0
      %p78 = por %p76, %p77
      %p79 = scmp.ne.s32.totalorder %s68, %s71
      %p80 = scmp.eq.s32.totalorder %s23, 1
      %p81 = por %p79, %p80
      %p82 = scmp.ne.s32.totalorder %s71, %s72
      %p83 = scmp.eq.s32.totalorder %s23, 0
      %p84 = por %p82, %p83
      %p85 = scmp.ne.s32.totalorder %s71, %s72
      %p86 = scmp.eq.s32.totalorder %s24, 1
      %p87 = por %p85, %p86
      %p89 = scmp.ne.s32.totalorder %s72, %s88
      %p90 = scmp.eq.s32.totalorder %s24, 0
      %p91 = por %p89, %p90
      %s92 = ssub.s32 %s25, %s37
      %p93 = scmp.eq.s32.totalorder %s92, 0
      %s95 = sadd.s32 %s94, 1
      %s96 = scalar_select %p93, %s94, %s95
      %p99 = pneg %p93
      %p100 = scmp.eq.s32.totalorder %s18, 1
      %p101 = por %p99, %p100
      %p102 = scmp.ne.s32.totalorder %s94, %s97
      %p103 = scmp.eq.s32.totalorder %s18, 0
      %p104 = por %p102, %p103
      %p105 = scmp.ne.s32.totalorder %s94, %s97
      %p106 = scmp.eq.s32.totalorder %s23, 1
      %p107 = por %p105, %p106
      %p108 = scmp.ne.s32.totalorder %s97, %s98
      %p109 = scmp.eq.s32.totalorder %s23, 0
      %p110 = por %p108, %p109
      %p111 = scmp.ne.s32.totalorder %s97, %s98
      %p112 = scmp.eq.s32.totalorder %s24, 1
      %p113 = por %p111, %p112
      %p115 = scmp.ne.s32.totalorder %s98, %s114
      %p116 = scmp.eq.s32.totalorder %s24, 0
      %p117 = por %p115, %p116
      %s118 = ssub.s32 %s25, %s37
      %s119 = ssub.s32 %s26, %s33
      %s120 = sor.u32 %s118, %s119
      %p121 = scmp.eq.s32.totalorder %s120, 0
      %s123 = sadd.s32 %s122, 1
      %s124 = scalar_select %p121, %s122, %s123
      %p127 = pneg %p121
      %p128 = scmp.eq.s32.totalorder %s18, 1
      %p129 = por %p127, %p128
      %p130 = scmp.ne.s32.totalorder %s122, %s125
      %p131 = scmp.eq.s32.totalorder %s18, 0
      %p132 = por %p130, %p131
      %p133 = scmp.ne.s32.totalorder %s122, %s125
      %p134 = scmp.eq.s32.totalorder %s23, 1
      %p135 = por %p133, %p134
      %p136 = scmp.ne.s32.totalorder %s125, %s126
      %p137 = scmp.eq.s32.totalorder %s23, 0
      %p138 = por %p136, %p137
      %p139 = scmp.ne.s32.totalorder %s125, %s126
      %p140 = scmp.eq.s32.totalorder %s24, 1
      %p141 = por %p139, %p140
      %p143 = scmp.ne.s32.totalorder %s126, %s142
      %p144 = scmp.eq.s32.totalorder %s24, 0
      %p145 = por %p143, %p144
      %p146 = scmp.le.s32.totalorder 1, %s18
      %p147 = scmp.lt.s32.totalorder %s18, 3
      %p148 = pnand %p146, %p147
      %p149 = pneg %p148
      // Predicated region
      $region9: #{tpu_custom_call.1} parent=5 // pred_check
        _
      $region10: #{tpu_custom_call.1} parent=5 // pred_check_branch
        %151 = sbr.rel (%p148) target = $region12
      $region11: #{tpu_custom_call.1} parent=5 // pred_region
        %s152 = ssub.s32 %s18, 1
      $region12: #{tpu_custom_call.1} parent=5 // pred_fallthru
        _
      %p153 = scmp.lt.s32.totalorder %s18, 2
      // Predicated region
      $region13: #{tpu_custom_call.1} parent=5 // pred_check
        %p154 = pneg %p153
      $region14: #{tpu_custom_call.1} parent=5 // pred_check_branch
        %156 = sbr.rel (%p154) target = $region16
      $region15: #{tpu_custom_call.1} parent=5 // pred_region
        // Predicated region
        $region17: #{tpu_custom_call.1} parent=15 // pred_check
          %p157 = pneg %p52
        $region18: #{tpu_custom_call.1} parent=15 // pred_check_branch
          %159 = sbr.rel (%p157) target = $region20
        $region19: #{tpu_custom_call.1} parent=15 // pred_region
          %s160 = sand.u32 %s42, 1
          %s161 = scalar_lea.sflag [#allocation4], %s160
          %s162 = sand.u32 %s42, 1
          %s163 = smul.addr %s162, 16
          %s164 = scalar_lea.vmem [#allocation3], %s163
          %s165 = smul.u32 2, %s26
          %s167 = ssub.s32 256, 256
          %168 = vsyncadd %s161, %s167
          %s169 = smul.addr %s25, 2
          %s170 = sadd.s32 %s165, %s169
          %s171 = smul.addr %s170, 128
          %s172 = scalar_lea.hbm %s0, %s171
          %s173 = sshll.u32 %s164, 4
          %s174 = int_to_ptr.vmem [resolvable:$true] %s173
          %179 = dma.hbm_to_vmem [thread:$0]  %s172, 256, %s174, %s161, 128, 128, 8
        $region20: #{tpu_custom_call.1} parent=15 // pred_fallthru
          _
        // Predicated region
        $region21: #{tpu_custom_call.1} parent=15 // pred_check
          %p180 = pneg %p78
        $region22: #{tpu_custom_call.1} parent=15 // pred_check_branch
          %182 = sbr.rel (%p180) target = $region24
        $region23: #{tpu_custom_call.1} parent=15 // pred_region
          %s183 = sand.u32 %s18, 1
          %s184 = scalar_lea.sflag [#allocation7], %s183
          %s185 = sand.u32 %s68, 1
          %s186 = smul.addr %s185, 8
          %s187 = scalar_lea.vmem [#allocation6], %s186
          %s189 = ssub.s32 128, 128
          %190 = vsyncadd %s184, %s189
          %s191 = smul.addr %s25, 128
          %s192 = scalar_lea.hbm %s1, %s191
          %s194 = sshll.u32 %s187, 4
          %s195 = int_to_ptr.vmem [resolvable:$true] %s194
          %197 = dma.hbm_to_vmem [thread:$0]  %s192, 128, %s195, %s184
        $region24: #{tpu_custom_call.1} parent=15 // pred_fallthru
          _
        // Predicated region
        $region25: #{tpu_custom_call.1} parent=15 // pred_check
          %p198 = pneg %p104
        $region26: #{tpu_custom_call.1} parent=15 // pred_check_branch
          %200 = sbr.rel (%p198) target = $region28
        $region27: #{tpu_custom_call.1} parent=15 // pred_region
          %s201 = sand.u32 %s18, 1
          %s202 = scalar_lea.sflag [#allocation7], %s201
          %s203 = sand.u32 %s94, 1
          %s204 = smul.addr %s203, 8
          %s205 = scalar_lea.vmem [#allocation8], %s204
          %s207 = ssub.s32 128, 128
          %208 = vsyncadd %s202, %s207
          %s209 = smul.addr %s25, 128
          %s210 = scalar_lea.hbm %s2, %s209
          %s212 = sshll.u32 %s205, 4
          %s213 = int_to_ptr.vmem [resolvable:$true] %s212
          %215 = dma.hbm_to_vmem [thread:$0]  %s210, 128, %s213, %s202
        $region28: #{tpu_custom_call.1} parent=15 // pred_fallthru
          _
      $region16: #{tpu_custom_call.1} parent=5 // pred_fallthru
        _
      %p216 = scmp.le.s32.totalorder 1, %s18
      %p217 = scmp.lt.s32.totalorder %s18, 3
      %p218 = pnand %p216, %p217
      %p219 = pneg %p218
      // Predicated region
      $region29: #{tpu_custom_call.1} parent=5 // pred_check
        _
      $region30: #{tpu_custom_call.1} parent=5 // pred_check_branch
        %221 = sbr.rel (%p218) target = $region32
      $region31: #{tpu_custom_call.1} parent=5 // pred_region
        %s222 = ssub.s32 %s18, 1
        %s223 = sand.u32 %s45, 1
        %s224 = scalar_lea.sflag [#allocation4], %s223
        %s225 = sand.u32 %s45, 1
        %s226 = smul.addr %s225, 16
        %s227 = scalar_lea.vmem [#allocation3], %s226
        // Predicated region
        $region33: #{tpu_custom_call.1} parent=31 // pred_check
          %p228 = pneg %p58
        $region34: #{tpu_custom_call.1} parent=31 // pred_check_branch
          %230 = sbr.rel (%p228) target = $region36
        $region35: #{tpu_custom_call.1} parent=31 // pred_region
          %231 = dma.done %s224, 256
        $region36: #{tpu_custom_call.1} parent=31 // pred_fallthru
          _
        %s232 = sand.u32 %s23, 1
        %s233 = scalar_lea.sflag [#allocation7], %s232
        %s234 = sand.u32 %s71, 1
        %s235 = smul.addr %s234, 8
        %s236 = scalar_lea.vmem [#allocation6], %s235
        // Predicated region
        $region37: #{tpu_custom_call.1} parent=31 // pred_check
          %p237 = pneg %p84
        $region38: #{tpu_custom_call.1} parent=31 // pred_check_branch
          %239 = sbr.rel (%p237) target = $region40
        $region39: #{tpu_custom_call.1} parent=31 // pred_region
          %240 = dma.done %s233, 128
        $region40: #{tpu_custom_call.1} parent=31 // pred_fallthru
          _
        %s241 = sand.u32 %s23, 1
        %s242 = scalar_lea.sflag [#allocation7], %s241
        %s243 = sand.u32 %s97, 1
        %s244 = smul.addr %s243, 8
        %s245 = scalar_lea.vmem [#allocation8], %s244
        // Predicated region
        $region41: #{tpu_custom_call.1} parent=31 // pred_check
          %p246 = pneg %p110
        $region42: #{tpu_custom_call.1} parent=31 // pred_check_branch
          %248 = sbr.rel (%p246) target = $region44
        $region43: #{tpu_custom_call.1} parent=31 // pred_region
          %249 = dma.done %s242, 128
        $region44: #{tpu_custom_call.1} parent=31 // pred_fallthru
          _
        %s250 = sand.u32 %s45, 1
        %s251 = scalar_lea.sflag [#allocation4], %s250
        %s252 = sand.u32 %s45, 1
        %s253 = smul.addr %s252, 16
        %s254 = scalar_lea.vmem [#allocation3], %s253
        %p255 = pneg %p58
        %p256 = pneg %p55
        %s257 = sand.u32 %s23, 1
        %s258 = scalar_lea.sflag [#allocation7], %s257
        %s259 = sand.u32 %s71, 1
        %s260 = smul.addr %s259, 8
        %s261 = scalar_lea.vmem [#allocation6], %s260
        %p262 = pneg %p84
        %p263 = pneg %p81
        %s264 = sand.u32 %s23, 1
        %s265 = scalar_lea.sflag [#allocation7], %s264
        %s266 = sand.u32 %s97, 1
        %s267 = smul.addr %s266, 8
        %s268 = scalar_lea.vmem [#allocation8], %s267
        %p269 = pneg %p110
        %p270 = pneg %p107
        %p271 = pneg %p138
        %p272 = pneg %p135
        %s273 = sand.u32 %s125, 1
        %s274 = scalar_lea.sflag [#allocation5], %s273
        %s275 = sand.u32 %s125, 1
        %s276 = smul.addr %s275, 16
        %s277 = scalar_lea.vmem [#allocation9], %s276
        %s278 = smul.u32 2, %s28
        %s279 = smul.u32 2, %s28
        %p280 = scmp.eq.s32.totalorder %s28, 0
        // Predicated region
        $region45: #{tpu_custom_call.1} parent=31 // pred_check
          %p281 = pneg %p280
        $region46: #{tpu_custom_call.1} parent=31 // pred_check_branch
          %283 = sbr.rel (%p281) target = $region48
        $region47: #{tpu_custom_call.1} parent=31 // pred_region
          %v284 = vld [vmem:[%s236] sm:$0xff]
          %vm285 = vcmp.gt.f32.partialorder %v284, 0.0
          %v286 = vadd.f32 %v284, 1.0
          %v287 = vmul.f32 %v284, 1.442695
          %v288 = vpow.pop %v287
          %v289 = vsel %vm285, %v286, %v288
          %v290 = vld [vmem:[%s245] sm:$0xff]
          %vm291 = vcmask 261120
          %v292 = vsel %vm291, %v290, 1.0
          %293 = vxpose.xlu0.b32.start [1/16] %v289, 128
          %294 = vxpose.xlu0.b32.cont [2/16] 0.0, 128
          %295 = vxpose.xlu0.b32.cont [3/16] 0.0, 128
          %296 = vxpose.xlu0.b32.cont [4/16] 0.0, 128
          %297 = vxpose.xlu0.b32.cont [5/16] 0.0, 128
          %298 = vxpose.xlu0.b32.cont [6/16] 0.0, 128
          %299 = vxpose.xlu0.b32.cont [7/16] 0.0, 128
          %300 = vxpose.xlu0.b32.cont [8/16] 0.0, 128
          %301 = vxpose.xlu0.b32.cont [9/16] 0.0, 128
          %302 = vxpose.xlu0.b32.cont [10/16] 0.0, 128
          %303 = vxpose.xlu0.b32.cont [11/16] 0.0, 128
          %304 = vxpose.xlu0.b32.cont [12/16] 0.0, 128
          %305 = vxpose.xlu0.b32.cont [13/16] 0.0, 128
          %306 = vxpose.xlu0.b32.cont [14/16] 0.0, 128
          %307 = vxpose.xlu0.b32.cont [15/16] 0.0, 128
          %308 = vxpose.xlu0.b32.end [16/16] 0.0, 128
          %v309 = vpop.trf.xlu0
          %v310 = vpop.trf.xlu0
          %v311 = vpop.trf.xlu0
          %v312 = vpop.trf.xlu0
          %v313 = vpop.trf.xlu0
          %v314 = vpop.trf.xlu0
          %v315 = vpop.trf.xlu0
          %v316 = vpop.trf.xlu0
          %v317 = vpop.trf.xlu0
          %v318 = vpop.trf.xlu0
          %v319 = vpop.trf.xlu0
          %v320 = vpop.trf.xlu0
          %v321 = vpop.trf.xlu0
          %v322 = vpop.trf.xlu0
          %v323 = vpop.trf.xlu0
          %v324 = vpop.trf.xlu0
          %vm325 = vcmask 64512
          %v327 = vsel %vm325, %v309, 0
          %v330 = vsel %vm325, %v310, 0
          %v333 = vsel %vm325, %v311, 0
          %v336 = vsel %vm325, %v312, 0
          %338 = vmatprep.subr.mxu0 0.0
          %339 = vmatpush1.msra.mxu0 0.0
          %340 = vmatprep.subr.mxu0 0.0
          %341 = vmatpush1.msra.mxu0 0.0
          %342 = vmatprep.subr.mxu0 0.0
          %343 = vmatpush1.msra.mxu0 0.0
          %344 = vmatprep.subr.mxu0 0.0
          %345 = vmatpush1.msra.mxu0 0.0
          %346 = vmatprep.subr.mxu0 0.0
          %347 = vmatpush1.msra.mxu0 0.0
          %348 = vmatprep.subr.mxu0 0.0
          %349 = vmatpush1.msra.mxu0 0.0
          %350 = vmatprep.subr.mxu0 0.0
          %351 = vmatpush1.msra.mxu0 0.0
          %352 = vmatprep.subr.mxu0 0.0
          %353 = vmatpush1.msra.mxu0 0.0
          %354 = vmatprep.subr.mxu0 0.0
          %355 = vmatpush1.msra.mxu0 0.0
          %356 = vmatprep.subr.mxu0 0.0
          %357 = vmatpush1.msra.mxu0 0.0
          %358 = vmatprep.subr.mxu0 0.0
          %359 = vmatpush1.msra.mxu0 0.0
          %360 = vmatprep.subr.mxu0 0.0
          %361 = vmatpush1.msra.mxu0 0.0
          %362 = vmatprep.subr.mxu0 0.0
          %363 = vmatpush1.msra.mxu0 0.0
          %364 = vmatprep.subr.mxu0 0.0
          %365 = vmatpush1.msra.mxu0 0.0
          %366 = vmatprep.subr.mxu0 0.0
          %367 = vmatpush1.msra.mxu0 0.0
          %368 = vmatprep.subr.mxu0 0.0
          %369 = vmatpush1.msra.mxu0 %v292
          %370 = vmatprep.subr.mxu0 0.0
          %371 = vmatpush2.msra.mxu0 0.0
          %372 = vmatprep.subr.mxu0 0.0
          %373 = vmatpush2.msra.mxu0 0.0
          %374 = vmatprep.subr.mxu0 0.0
          %375 = vmatpush2.msra.mxu0 0.0
          %376 = vmatprep.subr.mxu0 0.0
          %377 = vmatpush2.msra.mxu0 0.0
          %378 = vmatprep.subr.mxu0 0.0
          %379 = vmatpush2.msra.mxu0 0.0
          %380 = vmatprep.subr.mxu0 0.0
          %381 = vmatpush2.msra.mxu0 0.0
          %382 = vmatprep.subr.mxu0 0.0
          %383 = vmatpush2.msra.mxu0 0.0
          %384 = vmatprep.subr.mxu0 0.0
          %385 = vmatpush2.msra.mxu0 0.0
          %386 = vmatprep.subr.mxu0 0.0
          %387 = vmatpush2.msra.mxu0 0.0
          %388 = vmatprep.subr.mxu0 0.0
          %389 = vmatpush2.msra.mxu0 0.0
          %390 = vmatprep.subr.mxu0 0.0
          %391 = vmatpush2.msra.mxu0 0.0
          %392 = vmatprep.subr.mxu0 0.0
          %393 = vmatpush2.msra.mxu0 0.0
          %394 = vmatprep.subr.mxu0 0.0
          %395 = vmatpush2.msra.mxu0 0.0
          %396 = vmatprep.subr.mxu0 0.0
          %397 = vmatpush2.msra.mxu0 0.0
          %398 = vmatprep.subr.mxu0 0.0
          %399 = vmatpush2.msra.mxu0 0.0
          %400 = vmatprep.subr.mxu0 0.0
          %401 = vmatpush2.msra.mxu0 0.0
          %402 = vmatprep.mubr.f32.mxu0 0.0
          %403 = vmatmul.mubr.f32.gmra.mxu0 %v327
          %v404 = vpop.f32.mrf.mxu0
          %v405 = vadd.f32 0.0, %v404
          %v406 = vpop.f32.mrf.mxu0
          %407 = vmatprep.mubr.f32.mxu0 0.0
          %408 = vmatmul.mubr.f32.gmra.mxu0 %v330
          %v409 = vpop.f32.mrf.mxu0
          %v410 = vadd.f32 0.0, %v409
          %v411 = vpop.f32.mrf.mxu0
          %412 = vmatprep.mubr.f32.mxu0 0.0
          %413 = vmatmul.mubr.f32.gmra.mxu0 %v333
          %v414 = vpop.f32.mrf.mxu0
          %v415 = vadd.f32 0.0, %v414
          %v416 = vpop.f32.mrf.mxu0
          %417 = vmatprep.mubr.f32.mxu0 0.0
          %418 = vmatmul.mubr.f32.gmra.mxu0 %v336
          %v419 = vpop.f32.mrf.mxu0
          %v420 = vadd.f32 0.0, %v419
          %v421 = vpop.f32.mrf.mxu0
          %422 = vdwg.mxu0
          %vm423 = vcmask 269312
          %424 = vst.msk [vmem:[#allocation2] sm:$0xff] %vm423, %v405
          %425 = vst.msk [vmem:[#allocation2 + $0x8] sm:$0xff] %vm423, %v410
          %426 = vst.msk [vmem:[#allocation2 + $0x10] sm:$0xff] %vm423, %v415
          %427 = vst.msk [vmem:[#allocation2 + $0x18] sm:$0xff] %vm423, %v420
          %429 = vrot.lane.b32.xlu0 %v290, 96
          %v430 = vpop.permute.xlu0 %429
          %v432 = vsel %vm291, %v430, 1.0
          %434 = vrot.lane.b32.xlu0 %v289, 96
          %v435 = vpop.permute.xlu0 %434
          %437 = vxpose.xlu0.b32.start [1/16] %v435, 128
          %438 = vxpose.xlu0.b32.cont [2/16] 0.0, 128
          %439 = vxpose.xlu0.b32.cont [3/16] 0.0, 128
          %440 = vxpose.xlu0.b32.cont [4/16] 0.0, 128
          %441 = vxpose.xlu0.b32.cont [5/16] 0.0, 128
          %442 = vxpose.xlu0.b32.cont [6/16] 0.0, 128
          %443 = vxpose.xlu0.b32.cont [7/16] 0.0, 128
          %444 = vxpose.xlu0.b32.cont [8/16] 0.0, 128
          %445 = vxpose.xlu0.b32.cont [9/16] 0.0, 128
          %446 = vxpose.xlu0.b32.cont [10/16] 0.0, 128
          %447 = vxpose.xlu0.b32.cont [11/16] 0.0, 128
          %448 = vxpose.xlu0.b32.cont [12/16] 0.0, 128
          %449 = vxpose.xlu0.b32.cont [13/16] 0.0, 128
          %450 = vxpose.xlu0.b32.cont [14/16] 0.0, 128
          %451 = vxpose.xlu0.b32.cont [15/16] 0.0, 128
          %452 = vxpose.xlu0.b32.end [16/16] 0.0, 128
          %v453 = vpop.trf.xlu0
          %v454 = vpop.trf.xlu0
          %v455 = vpop.trf.xlu0
          %v456 = vpop.trf.xlu0
          %v457 = vpop.trf.xlu0
          %v458 = vpop.trf.xlu0
          %v459 = vpop.trf.xlu0
          %v460 = vpop.trf.xlu0
          %v461 = vpop.trf.xlu0
          %v462 = vpop.trf.xlu0
          %v463 = vpop.trf.xlu0
          %v464 = vpop.trf.xlu0
          %v465 = vpop.trf.xlu0
          %v466 = vpop.trf.xlu0
          %v467 = vpop.trf.xlu0
          %v468 = vpop.trf.xlu0
          %v470 = vsel %vm325, %v453, 0
          %v473 = vsel %vm325, %v454, 0
          %v476 = vsel %vm325, %v455, 0
          %v479 = vsel %vm325, %v456, 0
          %481 = vmatprep.subr.mxu0 0.0
          %482 = vmatpush1.msra.mxu0 0.0
          %483 = vmatprep.subr.mxu0 0.0
          %484 = vmatpush1.msra.mxu0 0.0
          %485 = vmatprep.subr.mxu0 0.0
          %486 = vmatpush1.msra.mxu0 0.0
          %487 = vmatprep.subr.mxu0 0.0
          %488 = vmatpush1.msra.mxu0 0.0
          %489 = vmatprep.subr.mxu0 0.0
          %490 = vmatpush1.msra.mxu0 0.0
          %491 = vmatprep.subr.mxu0 0.0
          %492 = vmatpush1.msra.mxu0 0.0
          %493 = vmatprep.subr.mxu0 0.0
          %494 = vmatpush1.msra.mxu0 0.0
          %495 = vmatprep.subr.mxu0 0.0
          %496 = vmatpush1.msra.mxu0 0.0
          %497 = vmatprep.subr.mxu0 0.0
          %498 = vmatpush1.msra.mxu0 0.0
          %499 = vmatprep.subr.mxu0 0.0
          %500 = vmatpush1.msra.mxu0 0.0
          %501 = vmatprep.subr.mxu0 0.0
          %502 = vmatpush1.msra.mxu0 0.0
          %503 = vmatprep.subr.mxu0 0.0
          %504 = vmatpush1.msra.mxu0 0.0
          %505 = vmatprep.subr.mxu0 0.0
          %506 = vmatpush1.msra.mxu0 0.0
          %507 = vmatprep.subr.mxu0 0.0
          %508 = vmatpush1.msra.mxu0 0.0
          %509 = vmatprep.subr.mxu0 0.0
          %510 = vmatpush1.msra.mxu0 0.0
          %511 = vmatprep.subr.mxu0 0.0
          %512 = vmatpush1.msra.mxu0 %v432
          %513 = vmatprep.subr.mxu0 0.0
          %514 = vmatpush2.msra.mxu0 0.0
          %515 = vmatprep.subr.mxu0 0.0
          %516 = vmatpush2.msra.mxu0 0.0
          %517 = vmatprep.subr.mxu0 0.0
          %518 = vmatpush2.msra.mxu0 0.0
          %519 = vmatprep.subr.mxu0 0.0
          %520 = vmatpush2.msra.mxu0 0.0
          %521 = vmatprep.subr.mxu0 0.0
          %522 = vmatpush2.msra.mxu0 0.0
          %523 = vmatprep.subr.mxu0 0.0
          %524 = vmatpush2.msra.mxu0 0.0
          %525 = vmatprep.subr.mxu0 0.0
          %526 = vmatpush2.msra.mxu0 0.0
          %527 = vmatprep.subr.mxu0 0.0
          %528 = vmatpush2.msra.mxu0 0.0
          %529 = vmatprep.subr.mxu0 0.0
          %530 = vmatpush2.msra.mxu0 0.0
          %531 = vmatprep.subr.mxu0 0.0
          %532 = vmatpush2.msra.mxu0 0.0
          %533 = vmatprep.subr.mxu0 0.0
          %534 = vmatpush2.msra.mxu0 0.0
          %535 = vmatprep.subr.mxu0 0.0
          %536 = vmatpush2.msra.mxu0 0.0
          %537 = vmatprep.subr.mxu0 0.0
          %538 = vmatpush2.msra.mxu0 0.0
          %539 = vmatprep.subr.mxu0 0.0
          %540 = vmatpush2.msra.mxu0 0.0
          %541 = vmatprep.subr.mxu0 0.0
          %542 = vmatpush2.msra.mxu0 0.0
          %543 = vmatprep.subr.mxu0 0.0
          %544 = vmatpush2.msra.mxu0 0.0
          %545 = vmatprep.mubr.f32.mxu0 0.0
          %546 = vmatmul.mubr.f32.gmra.mxu0 %v470
          %v547 = vpop.f32.mrf.mxu0
          %v548 = vadd.f32 0.0, %v547
          %v549 = vpop.f32.mrf.mxu0
          %550 = vmatprep.mubr.f32.mxu0 0.0
          %551 = vmatmul.mubr.f32.gmra.mxu0 %v473
          %v552 = vpop.f32.mrf.mxu0
          %v553 = vadd.f32 0.0, %v552
          %v554 = vpop.f32.mrf.mxu0
          %555 = vmatprep.mubr.f32.mxu0 0.0
          %556 = vmatmul.mubr.f32.gmra.mxu0 %v476
          %v557 = vpop.f32.mrf.mxu0
          %v558 = vadd.f32 0.0, %v557
          %v559 = vpop.f32.mrf.mxu0
          %560 = vmatprep.mubr.f32.mxu0 0.0
          %561 = vmatmul.mubr.f32.gmra.mxu0 %v479
          %v562 = vpop.f32.mrf.mxu0
          %v563 = vadd.f32 0.0, %v562
          %v564 = vpop.f32.mrf.mxu0
          %565 = vdwg.mxu0
          %s566 = scalar_lea.vmem [#allocation2], 32
          %567 = vst.msk [vmem:[%s566] sm:$0xff] %vm423, %v548
          %568 = vst.msk [vmem:[%s566 + $0x8] sm:$0xff] %vm423, %v553
          %569 = vst.msk [vmem:[%s566 + $0x10] sm:$0xff] %vm423, %v558
          %570 = vst.msk [vmem:[%s566 + $0x18] sm:$0xff] %vm423, %v563
        $region48: #{tpu_custom_call.1} parent=31 // pred_fallthru
          _
        %v571 = vld [vmem:[%s227] sm:$0xff]
        %v572 = vld [vmem:[%s227 + $0x8] sm:$0xff]
        %vm573 = vcmp.gt.f32.partialorder %v571, 0.0
        %vm574 = vcmp.gt.f32.partialorder %v572, 0.0
        %v575 = vadd.f32 %v571, 1.0
        %v576 = vadd.f32 %v572, 1.0
        %v577 = vmul.f32 %v571, 1.442695
        %v578 = vpow.pop %v577
        %v579 = vmul.f32 %v572, 1.442695
        %v580 = vpow.pop %v579
        %v581 = vsel %vm573, %v575, %v578
        %v582 = vsel %vm574, %v576, %v580
        %v583 = vld [vmem:[#allocation2] sm:$0xff]
        %v584 = vld [vmem:[#allocation2 + $0x8] sm:$0xff]
        %v585 = vld [vmem:[#allocation2 + $0x10] sm:$0xff]
        %v586 = vld [vmem:[#allocation2 + $0x18] sm:$0xff]
        %vm587 = vcmask 261120
        %v589 = vsel %vm587, %v581, 0
        %v592 = vsel %vm587, %v582, 0
        %594 = vmatprep.subr.mxu0 0.0
        %595 = vmatpush1.msra.mxu0 0.0
        %596 = vmatprep.subr.mxu0 0.0
        %597 = vmatpush1.msra.mxu0 0.0
        %598 = vmatprep.subr.mxu0 0.0
        %599 = vmatpush1.msra.mxu0 0.0
        %600 = vmatprep.subr.mxu0 0.0
        %601 = vmatpush1.msra.mxu0 0.0
        %602 = vmatprep.subr.mxu0 0.0
        %603 = vmatpush1.msra.mxu0 0.0
        %604 = vmatprep.subr.mxu0 0.0
        %605 = vmatpush1.msra.mxu0 0.0
        %606 = vmatprep.subr.mxu0 0.0
        %607 = vmatpush1.msra.mxu0 0.0
        %608 = vmatprep.subr.mxu0 0.0
        %609 = vmatpush1.msra.mxu0 0.0
        %610 = vmatprep.subr.mxu0 0.0
        %611 = vmatpush1.msra.mxu0 0.0
        %612 = vmatprep.subr.mxu0 0.0
        %613 = vmatpush1.msra.mxu0 0.0
        %614 = vmatprep.subr.mxu0 0.0
        %615 = vmatpush1.msra.mxu0 0.0
        %616 = vmatprep.subr.mxu0 0.0
        %617 = vmatpush1.msra.mxu0 0.0
        %618 = vmatprep.subr.mxu0 0.0
        %619 = vmatpush1.msra.mxu0 %v586
        %620 = vmatprep.subr.mxu0 0.0
        %621 = vmatpush1.msra.mxu0 %v585
        %622 = vmatprep.subr.mxu0 0.0
        %623 = vmatpush1.msra.mxu0 %v584
        %624 = vmatprep.subr.mxu0 0.0
        %625 = vmatpush1.msra.mxu0 %v583
        %626 = vmatprep.subr.mxu0 0.0
        %627 = vmatpush2.msra.mxu0 0.0
        %628 = vmatprep.subr.mxu0 0.0
        %629 = vmatpush2.msra.mxu0 0.0
        %630 = vmatprep.subr.mxu0 0.0
        %631 = vmatpush2.msra.mxu0 0.0
        %632 = vmatprep.subr.mxu0 0.0
        %633 = vmatpush2.msra.mxu0 0.0
        %634 = vmatprep.subr.mxu0 0.0
        %635 = vmatpush2.msra.mxu0 0.0
        %636 = vmatprep.subr.mxu0 0.0
        %637 = vmatpush2.msra.mxu0 0.0
        %638 = vmatprep.subr.mxu0 0.0
        %639 = vmatpush2.msra.mxu0 0.0
        %640 = vmatprep.subr.mxu0 0.0
        %641 = vmatpush2.msra.mxu0 0.0
        %642 = vmatprep.subr.mxu0 0.0
        %643 = vmatpush2.msra.mxu0 0.0
        %644 = vmatprep.subr.mxu0 0.0
        %645 = vmatpush2.msra.mxu0 0.0
        %646 = vmatprep.subr.mxu0 0.0
        %647 = vmatpush2.msra.mxu0 0.0
        %648 = vmatprep.subr.mxu0 0.0
        %649 = vmatpush2.msra.mxu0 0.0
        %650 = vmatprep.subr.mxu0 0.0
        %651 = vmatpush2.msra.mxu0 0.0
        %652 = vmatprep.subr.mxu0 0.0
        %653 = vmatpush2.msra.mxu0 0.0
        %654 = vmatprep.subr.mxu0 0.0
        %655 = vmatpush2.msra.mxu0 0.0
        %656 = vmatprep.subr.mxu0 0.0
        %657 = vmatpush2.msra.mxu0 0.0
        %658 = vmatprep.mubr.f32.mxu0 0.0
        %659 = vmatmul.mubr.f32.gmra.mxu0 %v589
        %v660 = vpop.f32.mrf.mxu0
        %v661 = vadd.f32 0.0, %v660
        %v662 = vpop.f32.mrf.mxu0
        %663 = vmatprep.mubr.f32.mxu0 0.0
        %664 = vmatmul.mubr.f32.gmra.mxu0 %v592
        %v665 = vpop.f32.mrf.mxu0
        %v666 = vadd.f32 0.0, %v665
        %v667 = vpop.f32.mrf.mxu0
        %668 = vdwg.mxu0
        %v669 = vadd.f32 %v661, 1e-06
        %v670 = vadd.f32 %v666, 1e-06
        %v671 = vrcp.pop %v669
        %v672 = vrcp.pop %v670
        %674 = vset.pattern.permute.xlu0 32
        %675 = vperm.xlu0 %674, %v671
        %v676 = vpop.permute.xlu0 %675
        %679 = vset.pattern.permute.xlu0 32
        %680 = vperm.xlu0 %679, %v672
        %v681 = vpop.permute.xlu0 %680
        %v683 = vmul.f32 %v661, %v676
        %v684 = vmul.f32 %v666, %v681
        %s685 = scalar_lea.vmem [#allocation2], 32
        %v686 = vld [vmem:[%s685] sm:$0xff]
        %v687 = vld [vmem:[%s685 + $0x8] sm:$0xff]
        %v688 = vld [vmem:[%s685 + $0x10] sm:$0xff]
        %v689 = vld [vmem:[%s685 + $0x18] sm:$0xff]
        %690 = vrot.lane.b32.xlu0 %v581, 96
        %v691 = vpop.permute.xlu0 %690
        %692 = vrot.lane.b32.xlu0 %v582, 96
        %v693 = vpop.permute.xlu0 %692
        %v694 = vsel %vm587, %v691, 0
        %v696 = vsel %vm587, %v693, 0
        %698 = vmatprep.subr.mxu0 0.0
        %699 = vmatpush1.msra.mxu0 0.0
        %700 = vmatprep.subr.mxu0 0.0
        %701 = vmatpush1.msra.mxu0 0.0
        %702 = vmatprep.subr.mxu0 0.0
        %703 = vmatpush1.msra.mxu0 0.0
        %704 = vmatprep.subr.mxu0 0.0
        %705 = vmatpush1.msra.mxu0 0.0
        %706 = vmatprep.subr.mxu0 0.0
        %707 = vmatpush1.msra.mxu0 0.0
        %708 = vmatprep.subr.mxu0 0.0
        %709 = vmatpush1.msra.mxu0 0.0
        %710 = vmatprep.subr.mxu0 0.0
        %711 = vmatpush1.msra.mxu0 0.0
        %712 = vmatprep.subr.mxu0 0.0
        %713 = vmatpush1.msra.mxu0 0.0
        %714 = vmatprep.subr.mxu0 0.0
        %715 = vmatpush1.msra.mxu0 0.0
        %716 = vmatprep.subr.mxu0 0.0
        %717 = vmatpush1.msra.mxu0 0.0
        %718 = vmatprep.subr.mxu0 0.0
        %719 = vmatpush1.msra.mxu0 0.0
        %720 = vmatprep.subr.mxu0 0.0
        %721 = vmatpush1.msra.mxu0 0.0
        %722 = vmatprep.subr.mxu0 0.0
        %723 = vmatpush1.msra.mxu0 %v689
        %724 = vmatprep.subr.mxu0 0.0
        %725 = vmatpush1.msra.mxu0 %v688
        %726 = vmatprep.subr.mxu0 0.0
        %727 = vmatpush1.msra.mxu0 %v687
        %728 = vmatprep.subr.mxu0 0.0
        %729 = vmatpush1.msra.mxu0 %v686
        %730 = vmatprep.subr.mxu0 0.0
        %731 = vmatpush2.msra.mxu0 0.0
        %732 = vmatprep.subr.mxu0 0.0
        %733 = vmatpush2.msra.mxu0 0.0
        %734 = vmatprep.subr.mxu0 0.0
        %735 = vmatpush2.msra.mxu0 0.0
        %736 = vmatprep.subr.mxu0 0.0
        %737 = vmatpush2.msra.mxu0 0.0
        %738 = vmatprep.subr.mxu0 0.0
        %739 = vmatpush2.msra.mxu0 0.0
        %740 = vmatprep.subr.mxu0 0.0
        %741 = vmatpush2.msra.mxu0 0.0
        %742 = vmatprep.subr.mxu0 0.0
        %743 = vmatpush2.msra.mxu0 0.0
        %744 = vmatprep.subr.mxu0 0.0
        %745 = vmatpush2.msra.mxu0 0.0
        %746 = vmatprep.subr.mxu0 0.0
        %747 = vmatpush2.msra.mxu0 0.0
        %748 = vmatprep.subr.mxu0 0.0
        %749 = vmatpush2.msra.mxu0 0.0
        %750 = vmatprep.subr.mxu0 0.0
        %751 = vmatpush2.msra.mxu0 0.0
        %752 = vmatprep.subr.mxu0 0.0
        %753 = vmatpush2.msra.mxu0 0.0
        %754 = vmatprep.subr.mxu0 0.0
        %755 = vmatpush2.msra.mxu0 0.0
        %756 = vmatprep.subr.mxu0 0.0
        %757 = vmatpush2.msra.mxu0 0.0
        %758 = vmatprep.subr.mxu0 0.0
        %759 = vmatpush2.msra.mxu0 0.0
        %760 = vmatprep.subr.mxu0 0.0
        %761 = vmatpush2.msra.mxu0 0.0
        %762 = vmatprep.mubr.f32.mxu0 0.0
        %763 = vmatmul.mubr.f32.gmra.mxu0 %v694
        %v764 = vpop.f32.mrf.mxu0
        %v765 = vadd.f32 0.0, %v764
        %v766 = vpop.f32.mrf.mxu0
        %767 = vmatprep.mubr.f32.mxu0 0.0
        %768 = vmatmul.mubr.f32.gmra.mxu0 %v696
        %v769 = vpop.f32.mrf.mxu0
        %v770 = vadd.f32 0.0, %v769
        %v771 = vpop.f32.mrf.mxu0
        %772 = vdwg.mxu0
        %v773 = vadd.f32 %v765, 1e-06
        %v774 = vadd.f32 %v770, 1e-06
        %v775 = vrcp.pop %v773
        %v776 = vrcp.pop %v774
        %778 = vset.pattern.permute.xlu0 32
        %779 = vperm.xlu0 %778, %v775
        %v780 = vpop.permute.xlu0 %779
        %783 = vset.pattern.permute.xlu0 32
        %784 = vperm.xlu0 %783, %v776
        %v785 = vpop.permute.xlu0 %784
        %v787 = vmul.f32 %v765, %v780
        %v788 = vmul.f32 %v770, %v785
        %791 = vrot.lane.b32.xlu0 %v787, 32
        %v792 = vpop.permute.xlu0 %791
        %793 = vrot.lane.b32.xlu0 %v788, 32
        %v794 = vpop.permute.xlu0 %793
        %v797 = vsel %vm587, %v683, %v792
        %v798 = vsel %vm587, %v684, %v794
        %vm799 = vcmask 523264
        %800 = vst.msk [vmem:[%s277] sm:$0xff] %vm799, %v797
        %801 = vst.msk [vmem:[%s277 + $0x8] sm:$0xff] %vm799, %v798
        %s802 = sand.u32 %s125, 1
        %s803 = scalar_lea.sflag [#allocation5], %s802
        %s804 = sand.u32 %s125, 1
        %s805 = smul.addr %s804, 16
        %s806 = scalar_lea.vmem [#allocation9], %s805
        // Predicated region
        $region49: #{tpu_custom_call.1} parent=31 // pred_check
          %p807 = pneg %p135
        $region50: #{tpu_custom_call.1} parent=31 // pred_check_branch
          %809 = sbr.rel (%p807) target = $region52
        $region51: #{tpu_custom_call.1} parent=31 // pred_region
          %s810 = smul.u32 2, %s28
          %s812 = ssub.s32 256, 256
          %813 = vsyncadd %s803, %s812
          %s814 = smul.addr %s27, 2
          %s815 = sadd.s32 %s810, %s814
          %s816 = smul.addr %s815, 128
          %s817 = scalar_lea.hbm %s3, %s816
          %s818 = sshll.u32 %s806, 4
          %s819 = int_to_ptr.vmem [resolvable:$true] %s818
          %824 = dma.vmem_to_hbm [thread:$0]  %s819, 256, %s817, %s803, 128, 128, 8
        $region52: #{tpu_custom_call.1} parent=31 // pred_fallthru
          _
      $region32: #{tpu_custom_call.1} parent=5 // pred_fallthru
        _
      %p825 = scmp.le.s32.totalorder 2, %s18
      // Predicated region
      $region53: #{tpu_custom_call.1} parent=5 // pred_check
        %p826 = pneg %p825
      $region54: #{tpu_custom_call.1} parent=5 // pred_check_branch
        %828 = sbr.rel (%p826) target = $region56
      $region55: #{tpu_custom_call.1} parent=5 // pred_region
        %s829 = ssub.s32 %s18, 2
        // Predicated region
        $region57: #{tpu_custom_call.1} parent=55 // pred_check
          %p830 = pneg %p141
        $region58: #{tpu_custom_call.1} parent=55 // pred_check_branch
          %832 = sbr.rel (%p830) target = $region60
        $region59: #{tpu_custom_call.1} parent=55 // pred_region
          %s833 = sand.u32 %s126, 1
          %s834 = scalar_lea.sflag [#allocation5], %s833
          %s835 = sand.u32 %s126, 1
          %s836 = smul.addr %s835, 16
          %s837 = scalar_lea.vmem [#allocation9], %s836
          %838 = dma.done %s834, 256
        $region60: #{tpu_custom_call.1} parent=55 // pred_fallthru
          _
      $region56: #{tpu_custom_call.1} parent=5 // pred_fallthru
        _
    $region6: #{tpu_custom_call.1} parent=1 // loop_footer
      %s22 = sadd.s32 1, %s18
    $region7: #{tpu_custom_call.1} parent=1 // loop_footer_branch
      %17 = sbr.rel target = $region3
    $region8: #{tpu_custom_call.1} parent=1 // loop_exit
      _
    %839 = vsyncpa [#allocation4], 1
    %s840 = scalar_lea.sflag [#allocation4], 1
    %841 = vsyncpa %s840, 1
    %842 = vsyncpa [#allocation7], 1
    %s843 = scalar_lea.sflag [#allocation7], 1
    %844 = vsyncpa %s843, 1
    %845 = vsyncpa [#allocation5], 1
    %s846 = scalar_lea.sflag [#allocation5], 1
    %847 = vsyncpa %s846, 1

</llo_original>
